<compile_context>
chip_gen: v6e
topology: v6e:2x2x1
jax: 0.10.0
libtpu: 0.0.40
codegen_flags: <defaults>
</compile_context>

<pallas_src>
import jax
import jax.numpy as jnp
from jax.experimental import pallas as pl
from jax.experimental.pallas import tpu as pltpu


def _adaptive_attention_kernel(x_ref, w1_ref, b1_ref, w2_ref, b2_ref, o_ref):
    # x tile in its native dtype; the final gate multiply happens in f32.
    x = x_ref[...]

    # ---- fc1 + ReLU: bf16 x bf16 on the MXU, f32 accumulation. ----
    h = jnp.dot(x.astype(w1_ref.dtype), w1_ref[...],
                preferred_element_type=jnp.float32)
    h = jnp.maximum(h + b1_ref[...], 0.0)

    # ---- fc2: bf16 x bf16 on the MXU, f32 accumulation. ----
    s = jnp.dot(h.astype(w2_ref.dtype), w2_ref[...],
                preferred_element_type=jnp.float32)
    s = s + b2_ref[...]

    # ---- numerically stable row softmax over the embed (lane) axis. ----
    m = jnp.max(s, axis=-1, keepdims=True)               # XLU reduce
    e = jnp.exp(s - m)                                    # EUP
    l = jnp.sum(e, axis=-1, keepdims=True)                # XLU reduce
    a = e * pl.reciprocal(l, approx=True)                 # EUP recip + 1 vmul

    # ---- gate the input. ----
    o_ref[...] = (a * x.astype(jnp.float32)).astype(o_ref.dtype)


def _round_up(v, m):
    return ((v + m - 1) // m) * m


def adaptive_attention(x, w1, b1, w2, b2, *, block_rows=512,
                       mxu_dtype=jnp.bfloat16):
    """out = softmax(relu(x @ w1 + b1) @ w2 + b2, axis=-1) * x  (fused Pallas TPU)."""
    orig_shape = x.shape
    e_dim = x.shape[-1]
    assert w1.shape == (e_dim, e_dim) and w2.shape == (e_dim, e_dim)
    assert b1.shape == (e_dim,) and b2.shape == (e_dim,)
    assert e_dim % 128 == 0, "embed_size must be a multiple of 128 (lane-dense)"

    x2 = x.reshape(-1, e_dim)
    m = x2.shape[0]

    # One-time dtype prep outside the kernel: bf16 weights for the MXU,
    # f32 biases (added to the f32 accumulator).
    w1_m = w1.astype(mxu_dtype)
    w2_m = w2.astype(mxu_dtype)
    b1_2d = b1.astype(jnp.float32).reshape(1, e_dim)
    b2_2d = b2.astype(jnp.float32).reshape(1, e_dim)

    # Row tile: multiple of 8 (sublane), capped at block_rows.  No padded copy
    # of x is materialized: the trailing grid block may be partial.
    tm = min(block_rows, _round_up(m, 8))
    if pl.cdiv(m, tm) < 2 and m > 8:
        # Guarantee >= 2 grid steps so the parallel axis can shard across both
        # TensorCores on v7x.
        tm = _round_up(pl.cdiv(m, 2), 8)
    grid = (pl.cdiv(m, tm),)

    cost = pl.CostEstimate(
        flops=4 * m * e_dim * e_dim,                       # two MXU matmuls
        transcendentals=m * e_dim + m,                     # exp + row recip
        bytes_accessed=(2 * m * e_dim * x.dtype.itemsize   # x in + out
                        + 2 * e_dim * e_dim * w1_m.dtype.itemsize
                        + 2 * e_dim * 4),                  # biases
    )

    out = pl.pallas_call(
        _adaptive_attention_kernel,
        out_shape=jax.ShapeDtypeStruct((m, e_dim), x.dtype),
        grid=grid,
        in_specs=[
            pl.BlockSpec((tm, e_dim), lambda i: (i, 0)),      # x row tile
            pl.BlockSpec((e_dim, e_dim), lambda i: (0, 0)),   # W1 (bf16, VMEM-resident)
            pl.BlockSpec((1, e_dim), lambda i: (0, 0)),       # b1 (f32)
            pl.BlockSpec((e_dim, e_dim), lambda i: (0, 0)),   # W2 (bf16, VMEM-resident)
            pl.BlockSpec((1, e_dim), lambda i: (0, 0)),       # b2 (f32)
        ],
        out_specs=pl.BlockSpec((tm, e_dim), lambda i: (i, 0)),
        compiler_params=pltpu.CompilerParams(
            # Row tiles are independent -> megacore-shardable on v7x.
            dimension_semantics=("parallel",),
        ),
        cost_estimate=cost,
    )(x2, w1_m, b1_2d, w2_m, b2_2d)

    return out.reshape(orig_shape)


if __name__ == "__main__":
    embed_size = 256
    batch, seq = 2, 8

    key = jax.random.PRNGKey(0)
    kx, kw1, kb1, kw2, kb2 = jax.random.split(key, 5)

    x = jax.random.normal(kx, (batch, seq, embed_size), dtype=jnp.float32)
    # Linear weights stored as (in, out): the kernel computes x @ W + b, i.e.
    # W = nn.Linear.weight.T when porting a PyTorch state dict.
    scale = 1.0 / jnp.sqrt(jnp.float32(embed_size))
    w1 = jax.random.normal(kw1, (embed_size, embed_size), dtype=jnp.float32) * scale
    b1 = jax.random.normal(kb1, (embed_size,), dtype=jnp.float32) * 0.01
    w2 = jax.random.normal(kw2, (embed_size, embed_size), dtype=jnp.float32) * scale
    b2 = jax.random.normal(kb2, (embed_size,), dtype=jnp.float32) * 0.01

    out = adaptive_attention(x, w1, b1, w2, b2)
    out = jax.block_until_ready(out)

    # Plain-JAX f32 reference of the module forward.
    h_ref = jnp.maximum(x @ w1 + b1, 0.0)
    s_ref = h_ref @ w2 + b2
    a_ref = jax.nn.softmax(s_ref, axis=-1)
    ref = a_ref * x

    assert out.shape == x.shape
    max_err = float(jnp.max(jnp.abs(out - ref)))
    # bf16 MXU operands -> tolerance is slightly looser than pure-f32.
    assert jnp.allclose(out, ref, rtol=2e-2, atol=2e-3), max_err

    print("KERNEL_OK")
</pallas_src>

<mosaic_0001>
module attributes {stable_mosaic.version = 11 : i64} {
  func.func @_adaptive_attention_kernel(%arg0: i32, %arg1: memref<8x256xf32, #tpu.memory_space<vmem>>, %arg2: memref<256x256xbf16, #tpu.memory_space<vmem>>, %arg3: memref<1x256xf32, #tpu.memory_space<vmem>>, %arg4: memref<256x256xbf16, #tpu.memory_space<vmem>>, %arg5: memref<1x256xf32, #tpu.memory_space<vmem>>, %arg6: memref<8x256xf32, #tpu.memory_space<vmem>>) attributes {dimension_semantics = [#tpu.dimension_semantics<parallel>], iteration_bounds = array<i64: 2>, scalar_prefetch = 0 : i64, scratch_operands = 0 : i64, tpu.core_type = #tpu.core_type<tc>, window_params = [{transform_indices = @transform_0, window_bounds = array<i64: 8, 256>}, {pipeline_mode = #tpu.pipeline_mode<synchronous>, transform_indices = @transform_1, window_bounds = array<i64: 256, 256>}, {pipeline_mode = #tpu.pipeline_mode<synchronous>, transform_indices = @transform_2, window_bounds = array<i64: 1, 256>}, {pipeline_mode = #tpu.pipeline_mode<synchronous>, transform_indices = @transform_3, window_bounds = array<i64: 256, 256>}, {pipeline_mode = #tpu.pipeline_mode<synchronous>, transform_indices = @transform_4, window_bounds = array<i64: 1, 256>}, {transform_indices = @transform_5, window_bounds = array<i64: 8, 256>}]} {
    %c0 = arith.constant 0 : index
    %c0_0 = arith.constant 0 : index
    %0 = vector.load %arg1[%c0, %c0_0] : memref<8x256xf32, #tpu.memory_space<vmem>>, vector<8x256xf32>
    %1 = arith.truncf %0 : vector<8x256xf32> to vector<8x256xbf16>
    %c0_1 = arith.constant 0 : index
    %c0_2 = arith.constant 0 : index
    %2 = vector.load %arg2[%c0_1, %c0_2] : memref<256x256xbf16, #tpu.memory_space<vmem>>, vector<256x256xbf16>
    %cst = arith.constant dense<0.000000e+00> : vector<8x256xf32>
    %3 = tpu.matmul %1, %2, %cst {dimension_numbers = #tpu.dot_dimension_numbers<[1], [0], [0], [1], [0, 0, 1, 1], [], []>} : vector<8x256xbf16>, vector<256x256xbf16>, vector<8x256xf32> -> vector<8x256xf32>
    %c0_3 = arith.constant 0 : index
    %c0_4 = arith.constant 0 : index
    %4 = vector.load %arg3[%c0_3, %c0_4] : memref<1x256xf32, #tpu.memory_space<vmem>>, vector<1x256xf32>
    %5 = vector.broadcast %4 : vector<1x256xf32> to vector<8x256xf32>
    %6 = arith.addf %3, %5 : vector<8x256xf32>
    %cst_5 = arith.constant 0.000000e+00 : f32
    %7 = vector.broadcast %cst_5 : f32 to vector<8x256xf32>
    %8 = arith.maximumf %6, %7 : vector<8x256xf32>
    %9 = arith.truncf %8 : vector<8x256xf32> to vector<8x256xbf16>
    %c0_6 = arith.constant 0 : index
    %c0_7 = arith.constant 0 : index
    %10 = vector.load %arg4[%c0_6, %c0_7] : memref<256x256xbf16, #tpu.memory_space<vmem>>, vector<256x256xbf16>
    %cst_8 = arith.constant dense<0.000000e+00> : vector<8x256xf32>
    %11 = tpu.matmul %9, %10, %cst_8 {dimension_numbers = #tpu.dot_dimension_numbers<[1], [0], [0], [1], [0, 0, 1, 1], [], []>} : vector<8x256xbf16>, vector<256x256xbf16>, vector<8x256xf32> -> vector<8x256xf32>
    %c0_9 = arith.constant 0 : index
    %c0_10 = arith.constant 0 : index
    %12 = vector.load %arg5[%c0_9, %c0_10] : memref<1x256xf32, #tpu.memory_space<vmem>>, vector<1x256xf32>
    %13 = vector.broadcast %12 : vector<1x256xf32> to vector<8x256xf32>
    %14 = arith.addf %11, %13 : vector<8x256xf32>
    %cst_11 = arith.constant dense<0xFF800000> : vector<8xf32>
    %15 = vector.multi_reduction <maximumf>, %14, %cst_11 [1] : vector<8x256xf32> to vector<8xf32>
    %16 = vector.shape_cast %15 : vector<8xf32> to vector<8x1xf32>
    %17 = vector.broadcast %16 : vector<8x1xf32> to vector<8x256xf32>
    %18 = arith.subf %14, %17 : vector<8x256xf32>
    %19 = math.exp %18 : vector<8x256xf32>
    %cst_12 = arith.constant dense<0.000000e+00> : vector<8xf32>
    %20 = vector.multi_reduction <add>, %19, %cst_12 [1] : vector<8x256xf32> to vector<8xf32>
    %21 = vector.shape_cast %20 : vector<8xf32> to vector<8x1xf32>
    %22 = tpu.reciprocal %21 {approx = true} : vector<8x1xf32> -> vector<8x1xf32>
    %23 = vector.broadcast %22 : vector<8x1xf32> to vector<8x256xf32>
    %24 = arith.mulf %19, %23 : vector<8x256xf32>
    %25 = arith.mulf %24, %0 : vector<8x256xf32>
    %c0_13 = arith.constant 0 : index
    %c0_14 = arith.constant 0 : index
    %26 = vector.load %arg6[%c0_13, %c0_14] : memref<8x256xf32, #tpu.memory_space<vmem>>, vector<8x256xf32>
    tpu.vector_store %arg6[%c0_13, %c0_14], %25 {strides = array<i32>} : memref<8x256xf32, #tpu.memory_space<vmem>>, vector<8x256xf32>,
    return
  }
  func.func @transform_0(%arg0: i32) -> (i32, i32) {
    %c0_i32 = arith.constant 0 : i32
    %c0_i32_0 = arith.constant 0 : i32
    return %arg0, %c0_i32 : i32, i32
  }
  func.func @transform_1(%arg0: i32) -> (i32, i32) {
    %c0_i32 = arith.constant 0 : i32
    %c0_i32_0 = arith.constant 0 : i32
    %c0_i32_1 = arith.constant 0 : i32
    return %c0_i32, %c0_i32_0 : i32, i32
  }
  func.func @transform_2(%arg0: i32) -> (i32, i32) {
    %c0_i32 = arith.constant 0 : i32
    %c0_i32_0 = arith.constant 0 : i32
    %c0_i32_1 = arith.constant 0 : i32
    return %c0_i32, %c0_i32_0 : i32, i32
  }
  func.func @transform_3(%arg0: i32) -> (i32, i32) {
    %c0_i32 = arith.constant 0 : i32
    %c0_i32_0 = arith.constant 0 : i32
    %c0_i32_1 = arith.constant 0 : i32
    return %c0_i32, %c0_i32_0 : i32, i32
  }
  func.func @transform_4(%arg0: i32) -> (i32, i32) {
    %c0_i32 = arith.constant 0 : i32
    %c0_i32_0 = arith.constant 0 : i32
    %c0_i32_1 = arith.constant 0 : i32
    return %c0_i32, %c0_i32_0 : i32, i32
  }
  func.func @transform_5(%arg0: i32) -> (i32, i32) {
    %c0_i32 = arith.constant 0 : i32
    %c0_i32_0 = arith.constant 0 : i32
    return %arg0, %c0_i32 : i32, i32
  }
}

</mosaic_0001>

<llo_original>
// kernel: tpu_custom_call.1
$region0: #{tpu_custom_call.1}
  #allocation0 [shape = 'u32[]', space=smem, size = 0x4, offset = 0x4, fixed_abs, tag = 'smem constant byte address 0x4 - core index']
  #allocation1 [shape = 'u32[144,128]{1,0:T(1,128)}', space=vmem, size = 0x12000, scoped, tag = 'internal scratch']
  %s0 = inlined_call_operand.hbm [shape: f32[16,256], index: 0, kind: input, shape index: {}]
  %s1 = inlined_call_operand.hbm [shape: bf16[256,256], index: 1, kind: input, shape index: {}]
  %s2 = inlined_call_operand.vmem [shape: f32[1,256], index: 2, kind: input, shape index: {}]
  %s3 = inlined_call_operand.hbm [shape: bf16[256,256], index: 3, kind: input, shape index: {}]
  %s4 = inlined_call_operand.vmem [shape: f32[1,256], index: 4, kind: input, shape index: {}]
  %s5 = inlined_call_operand.hbm [shape: f32[16,256], index: 5, kind: output, shape index: {}]
  %s6 = sld [smem:[#allocation0]]
  $region65: #{tpu_custom_call.1} parent=0
    _
  %s8 = ssub.s32 1, %s6
  %s9 = scalar_select 0, %s8, %s6
  $region1: #{tpu_custom_call.1} parent=0
    #allocation2 [shape = 'u8[16384]{0}', space=vmem, size = 0x4000, scoped, tag = 'input window, operand 0']
    #allocation3 [shape = 's32[2]{0}', space=sflag, size = 0x8, scoped, tag = 'scoped memory for tpu_custom_call.1']
    #allocation4 [shape = 's32[2]{0}', space=sflag, size = 0x8, scoped, tag = 'scoped memory for tpu_custom_call.1']
    #allocation5 [shape = 'u8[131072]{0}', space=vmem, size = 0x20000, scoped, tag = 'input window, operand 1, single buffered']
    #allocation6 [shape = 's32[1]{0}', space=sflag, size = 0x4, scoped, tag = 'scoped memory for tpu_custom_call.1']
    #allocation7 [shape = 'u8[131072]{0}', space=vmem, size = 0x20000, scoped, tag = 'input window, operand 3, single buffered']
    #allocation8 [shape = 'u8[16384]{0}', space=vmem, size = 0x4000, scoped, tag = 'output window, operand 0']
    %10 = vsyncpa [#allocation3], 0
    %s11 = scalar_lea.sflag [#allocation3], 1
    %12 = vsyncpa %s11, 0
    %13 = vsyncpa [#allocation6], 0
    %14 = vsyncpa [#allocation4], 0
    %s15 = scalar_lea.sflag [#allocation4], 1
    %16 = vsyncpa %s15, 0
    loop: start=0, step=1, limit=4
    $region2: #{tpu_custom_call.1} parent=1 // loop_pre_header
      _
    $region3: #{tpu_custom_call.1} parent=1 // loop_header
      %s18 = sphi 0, %s22
      %p19 = scmp.ge.s32.totalorder %s18, 4
      %s28 = sphi 0, %s30
      %s31 = sphi 0, %s28
      %s32 = sphi 0, %s31
      %s48 = sphi 0, %s32
      %s52 = sphi 0, %s52
      %s54 = sphi 0, %s52
      %s55 = sphi 0, %s54
      %s69 = sphi 0, %s55
      %s73 = sphi 0, %s73
      %s75 = sphi 0, %s73
      %s76 = sphi 0, %s75
      %s90 = sphi 0, %s76
      %s94 = sphi 0, %s94
      %s96 = sphi 0, %s94
      %s97 = sphi 0, %s96
      %s111 = sphi 0, %s97
      %s115 = sphi 0, %s115
      %s117 = sphi 0, %s115
      %s118 = sphi 0, %s117
      %s132 = sphi 0, %s118
      %s138 = sphi 0, %s140
      %s141 = sphi 0, %s138
      %s142 = sphi 0, %s141
      %s158 = sphi 0, %s142
    $region4: #{tpu_custom_call.1} parent=1 // loop_header_branch
      %21 = sbr.rel (%p19) target = $region8
    $region5: #{tpu_custom_call.1} parent=1 // loop_body
      %s23 = ssub.s32 %s18, 1
      %s24 = ssub.s32 %s18, 2
      %s25 = sadd.s32 %s18, 1
      %s26 = ssub.s32 %s18, %s25
      %p27 = scmp.eq.s32.totalorder %s26, 0
      %s29 = sadd.s32 %s28, 1
      %s30 = scalar_select %p27, %s28, %s29
      %p33 = pneg %p27
      %p34 = scmp.eq.s32.totalorder %s18, 1
      %p35 = por %p33, %p34
      %p36 = scmp.ne.s32.totalorder %s28, %s31
      %p37 = scmp.eq.s32.totalorder %s18, 0
      %p38 = por %p36, %p37
      %p39 = scmp.ne.s32.totalorder %s28, %s31
      %p40 = scmp.eq.s32.totalorder %s23, 1
      %p41 = por %p39, %p40
      %p42 = scmp.ne.s32.totalorder %s31, %s32
      %p43 = scmp.eq.s32.totalorder %s23, 0
      %p44 = por %p42, %p43
      %p45 = scmp.ne.s32.totalorder %s31, %s32
      %p46 = scmp.eq.s32.totalorder %s24, 1
      %p47 = por %p45, %p46
      %p49 = scmp.ne.s32.totalorder %s32, %s48
      %p50 = scmp.eq.s32.totalorder %s24, 0
      %p51 = por %p49, %p50
      %s53 = sadd.s32 %s52, 1
      %p56 = scmp.eq.s32.totalorder %s18, 1
      %p57 = scmp.ne.s32.totalorder %s52, %s54
      %p58 = scmp.eq.s32.totalorder %s18, 0
      %p59 = por %p57, %p58
      %p60 = scmp.ne.s32.totalorder %s52, %s54
      %p61 = scmp.eq.s32.totalorder %s23, 1
      %p62 = por %p60, %p61
      %p63 = scmp.ne.s32.totalorder %s54, %s55
      %p64 = scmp.eq.s32.totalorder %s23, 0
      %p65 = por %p63, %p64
      %p66 = scmp.ne.s32.totalorder %s54, %s55
      %p67 = scmp.eq.s32.totalorder %s24, 1
      %p68 = por %p66, %p67
      %p70 = scmp.ne.s32.totalorder %s55, %s69
      %p71 = scmp.eq.s32.totalorder %s24, 0
      %p72 = por %p70, %p71
      %s74 = sadd.s32 %s73, 1
      %p77 = scmp.eq.s32.totalorder %s18, 1
      %p78 = scmp.ne.s32.totalorder %s73, %s75
      %p79 = scmp.eq.s32.totalorder %s18, 0
      %p80 = por %p78, %p79
      %p81 = scmp.ne.s32.totalorder %s73, %s75
      %p82 = scmp.eq.s32.totalorder %s23, 1
      %p83 = por %p81, %p82
      %p84 = scmp.ne.s32.totalorder %s75, %s76
      %p85 = scmp.eq.s32.totalorder %s23, 0
      %p86 = por %p84, %p85
      %p87 = scmp.ne.s32.totalorder %s75, %s76
      %p88 = scmp.eq.s32.totalorder %s24, 1
      %p89 = por %p87, %p88
      %p91 = scmp.ne.s32.totalorder %s76, %s90
      %p92 = scmp.eq.s32.totalorder %s24, 0
      %p93 = por %p91, %p92
      %s95 = sadd.s32 %s94, 1
      %p98 = scmp.eq.s32.totalorder %s18, 1
      %p99 = scmp.ne.s32.totalorder %s94, %s96
      %p100 = scmp.eq.s32.totalorder %s18, 0
      %p101 = por %p99, %p100
      %p102 = scmp.ne.s32.totalorder %s94, %s96
      %p103 = scmp.eq.s32.totalorder %s23, 1
      %p104 = por %p102, %p103
      %p105 = scmp.ne.s32.totalorder %s96, %s97
      %p106 = scmp.eq.s32.totalorder %s23, 0
      %p107 = por %p105, %p106
      %p108 = scmp.ne.s32.totalorder %s96, %s97
      %p109 = scmp.eq.s32.totalorder %s24, 1
      %p110 = por %p108, %p109
      %p112 = scmp.ne.s32.totalorder %s97, %s111
      %p113 = scmp.eq.s32.totalorder %s24, 0
      %p114 = por %p112, %p113
      %s116 = sadd.s32 %s115, 1
      %p119 = scmp.eq.s32.totalorder %s18, 1
      %p120 = scmp.ne.s32.totalorder %s115, %s117
      %p121 = scmp.eq.s32.totalorder %s18, 0
      %p122 = por %p120, %p121
      %p123 = scmp.ne.s32.totalorder %s115, %s117
      %p124 = scmp.eq.s32.totalorder %s23, 1
      %p125 = por %p123, %p124
      %p126 = scmp.ne.s32.totalorder %s117, %s118
      %p127 = scmp.eq.s32.totalorder %s23, 0
      %p128 = por %p126, %p127
      %p129 = scmp.ne.s32.totalorder %s117, %s118
      %p130 = scmp.eq.s32.totalorder %s24, 1
      %p131 = por %p129, %p130
      %p133 = scmp.ne.s32.totalorder %s118, %s132
      %p134 = scmp.eq.s32.totalorder %s24, 0
      %p135 = por %p133, %p134
      %s136 = ssub.s32 %s18, %s25
      %p137 = scmp.eq.s32.totalorder %s136, 0
      %s139 = sadd.s32 %s138, 1
      %s140 = scalar_select %p137, %s138, %s139
      %p143 = pneg %p137
      %p144 = scmp.eq.s32.totalorder %s18, 1
      %p145 = por %p143, %p144
      %p146 = scmp.ne.s32.totalorder %s138, %s141
      %p147 = scmp.eq.s32.totalorder %s18, 0
      %p148 = por %p146, %p147
      %p149 = scmp.ne.s32.totalorder %s138, %s141
      %p150 = scmp.eq.s32.totalorder %s23, 1
      %p151 = por %p149, %p150
      %p152 = scmp.ne.s32.totalorder %s141, %s142
      %p153 = scmp.eq.s32.totalorder %s23, 0
      %p154 = por %p152, %p153
      %p155 = scmp.ne.s32.totalorder %s141, %s142
      %p156 = scmp.eq.s32.totalorder %s24, 1
      %p157 = por %p155, %p156
      %p159 = scmp.ne.s32.totalorder %s142, %s158
      %p160 = scmp.eq.s32.totalorder %s24, 0
      %p161 = por %p159, %p160
      %p162 = scmp.le.s32.totalorder 1, %s18
      %p163 = scmp.lt.s32.totalorder %s18, 3
      %p164 = pnand %p162, %p163
      %p165 = pneg %p164
      // Predicated region
      $region9: #{tpu_custom_call.1} parent=5 // pred_check
        _
      $region10: #{tpu_custom_call.1} parent=5 // pred_check_branch
        %167 = sbr.rel (%p164) target = $region12
      $region11: #{tpu_custom_call.1} parent=5 // pred_region
        %s168 = ssub.s32 %s18, 1
        // Predicated region
        $region13: #{tpu_custom_call.1} parent=11 // pred_check
          %p169 = pneg %p65
        $region14: #{tpu_custom_call.1} parent=11 // pred_check_branch
          %171 = sbr.rel (%p169) target = $region16
        $region15: #{tpu_custom_call.1} parent=11 // pred_region
          %s173 = ssub.s32 4096, 4096
          %174 = vsyncadd [#allocation6], %s173
          %s175 = sshll.u32 [#allocation5], 4
          %s176 = int_to_ptr.vmem [resolvable:$true] %s175
          %181 = dma.hbm_to_vmem [thread:$0]  %s1, 4096, %s176, [#allocation6], 128, 128, 8
        $region16: #{tpu_custom_call.1} parent=11 // pred_fallthru
          _
        // Predicated region
        $region17: #{tpu_custom_call.1} parent=11 // pred_check
          %p182 = pneg %p86
        $region18: #{tpu_custom_call.1} parent=11 // pred_check_branch
          %184 = sbr.rel (%p182) target = $region20
        $region19: #{tpu_custom_call.1} parent=11 // pred_region
          _
        $region20: #{tpu_custom_call.1} parent=11 // pred_fallthru
          _
        // Predicated region
        $region21: #{tpu_custom_call.1} parent=11 // pred_check
          %p185 = pneg %p107
        $region22: #{tpu_custom_call.1} parent=11 // pred_check_branch
          %187 = sbr.rel (%p185) target = $region24
        $region23: #{tpu_custom_call.1} parent=11 // pred_region
          %s189 = ssub.s32 4096, 4096
          %190 = vsyncadd [#allocation6], %s189
          %s191 = sshll.u32 [#allocation7], 4
          %s192 = int_to_ptr.vmem [resolvable:$true] %s191
          %197 = dma.hbm_to_vmem [thread:$0]  %s3, 4096, %s192, [#allocation6], 128, 128, 8
        $region24: #{tpu_custom_call.1} parent=11 // pred_fallthru
          _
        // Predicated region
        $region25: #{tpu_custom_call.1} parent=11 // pred_check
          %p198 = pneg %p128
        $region26: #{tpu_custom_call.1} parent=11 // pred_check_branch
          %200 = sbr.rel (%p198) target = $region28
        $region27: #{tpu_custom_call.1} parent=11 // pred_region
          _
        $region28: #{tpu_custom_call.1} parent=11 // pred_fallthru
          _
      $region12: #{tpu_custom_call.1} parent=5 // pred_fallthru
        _
      %p201 = scmp.lt.s32.totalorder %s18, 2
      // Predicated region
      $region29: #{tpu_custom_call.1} parent=5 // pred_check
        %p202 = pneg %p201
      $region30: #{tpu_custom_call.1} parent=5 // pred_check_branch
        %204 = sbr.rel (%p202) target = $region32
      $region31: #{tpu_custom_call.1} parent=5 // pred_region
        // Predicated region
        $region33: #{tpu_custom_call.1} parent=31 // pred_check
          %p205 = pneg %p38
        $region34: #{tpu_custom_call.1} parent=31 // pred_check_branch
          %207 = sbr.rel (%p205) target = $region36
        $region35: #{tpu_custom_call.1} parent=31 // pred_region
          %s208 = sand.u32 %s28, 1
          %s209 = scalar_lea.sflag [#allocation3], %s208
          %s210 = sand.u32 %s28, 1
          %s211 = smul.addr %s210, 16
          %s212 = scalar_lea.vmem [#allocation2], %s211
          %s214 = ssub.s32 256, 256
          %215 = vsyncadd %s209, %s214
          %s216 = smul.addr %s18, 2
          %s217 = smul.addr %s216, 128
          %s218 = scalar_lea.hbm %s0, %s217
          %s220 = sshll.u32 %s212, 4
          %s221 = int_to_ptr.vmem [resolvable:$true] %s220
          %223 = dma.hbm_to_vmem [thread:$0]  %s218, 256, %s221, %s209
        $region36: #{tpu_custom_call.1} parent=31 // pred_fallthru
          _
      $region32: #{tpu_custom_call.1} parent=5 // pred_fallthru
        _
      %p224 = scmp.le.s32.totalorder 1, %s18
      %p225 = scmp.lt.s32.totalorder %s18, 3
      %p226 = pnand %p224, %p225
      %p227 = pneg %p226
      // Predicated region
      $region37: #{tpu_custom_call.1} parent=5 // pred_check
        _
      $region38: #{tpu_custom_call.1} parent=5 // pred_check_branch
        %229 = sbr.rel (%p226) target = $region40
      $region39: #{tpu_custom_call.1} parent=5 // pred_region
        %s230 = ssub.s32 %s18, 1
        %s231 = sand.u32 %s31, 1
        %s232 = scalar_lea.sflag [#allocation3], %s231
        %s233 = sand.u32 %s31, 1
        %s234 = smul.addr %s233, 16
        %s235 = scalar_lea.vmem [#allocation2], %s234
        // Predicated region
        $region41: #{tpu_custom_call.1} parent=39 // pred_check
          %p236 = pneg %p44
        $region42: #{tpu_custom_call.1} parent=39 // pred_check_branch
          %238 = sbr.rel (%p236) target = $region44
        $region43: #{tpu_custom_call.1} parent=39 // pred_region
          %239 = dma.done %s232, 256
        $region44: #{tpu_custom_call.1} parent=39 // pred_fallthru
          _
        // Predicated region
        $region45: #{tpu_custom_call.1} parent=39 // pred_check
          %p240 = pneg %p65
        $region46: #{tpu_custom_call.1} parent=39 // pred_check_branch
          %242 = sbr.rel (%p240) target = $region48
        $region47: #{tpu_custom_call.1} parent=39 // pred_region
          %243 = dma.done [#allocation6], 4096
        $region48: #{tpu_custom_call.1} parent=39 // pred_fallthru
          _
        // Predicated region
        $region49: #{tpu_custom_call.1} parent=39 // pred_check
          %p244 = pneg %p107
        $region50: #{tpu_custom_call.1} parent=39 // pred_check_branch
          %246 = sbr.rel (%p244) target = $region52
        $region51: #{tpu_custom_call.1} parent=39 // pred_region
          %247 = dma.done [#allocation6], 4096
        $region52: #{tpu_custom_call.1} parent=39 // pred_fallthru
          _
        %s248 = sand.u32 %s31, 1
        %s249 = scalar_lea.sflag [#allocation3], %s248
        %s250 = sand.u32 %s31, 1
        %s251 = smul.addr %s250, 16
        %s252 = scalar_lea.vmem [#allocation2], %s251
        %p253 = pneg %p44
        %p254 = pneg %p41
        %p255 = pneg %p65
        %p256 = pneg %p62
        %p257 = pneg %p86
        %p258 = pneg %p83
        %p259 = pneg %p107
        %p260 = pneg %p104
        %p261 = pneg %p128
        %p262 = pneg %p125
        %p263 = pneg %p154
        %p264 = pneg %p151
        %s265 = sand.u32 %s141, 1
        %s266 = scalar_lea.sflag [#allocation4], %s265
        %s267 = sand.u32 %s141, 1
        %s268 = smul.addr %s267, 16
        %s269 = scalar_lea.vmem [#allocation8], %s268
        %v270 = vld [vmem:[%s235] sm:$0xff]
        %v271 = vld [vmem:[%s235 + $0x8] sm:$0xff]
        %v272 = vpack.c.bf16 %v270, %v270
        %v273 = vpack.c.bf16 %v271, %v271
        %v274 = vld [vmem:[#allocation5] sm:$0xff]
        %v275 = vld [vmem:[#allocation5 + $0x8] sm:$0xff]
        %v276 = vld [vmem:[#allocation5 + $0x10] sm:$0xff]
        %v277 = vld [vmem:[#allocation5 + $0x18] sm:$0xff]
        %v278 = vld [vmem:[#allocation5 + $0x20] sm:$0xff]
        %v279 = vld [vmem:[#allocation5 + $0x28] sm:$0xff]
        %v280 = vld [vmem:[#allocation5 + $0x30] sm:$0xff]
        %v281 = vld [vmem:[#allocation5 + $0x38] sm:$0xff]
        %v282 = vld [vmem:[#allocation5 + $0x40] sm:$0xff]
        %v283 = vld [vmem:[#allocation5 + $0x48] sm:$0xff]
        %v284 = vld [vmem:[#allocation5 + $0x50] sm:$0xff]
        %v285 = vld [vmem:[#allocation5 + $0x58] sm:$0xff]
        %v286 = vld [vmem:[#allocation5 + $0x60] sm:$0xff]
        %v287 = vld [vmem:[#allocation5 + $0x68] sm:$0xff]
        %v288 = vld [vmem:[#allocation5 + $0x70] sm:$0xff]
        %v289 = vld [vmem:[#allocation5 + $0x78] sm:$0xff]
        %v290 = vld [vmem:[#allocation5 + $0x80] sm:$0xff]
        %v291 = vld [vmem:[#allocation5 + $0x88] sm:$0xff]
        %v292 = vld [vmem:[#allocation5 + $0x90] sm:$0xff]
        %v293 = vld [vmem:[#allocation5 + $0x98] sm:$0xff]
        %v294 = vld [vmem:[#allocation5 + $0xa0] sm:$0xff]
        %v295 = vld [vmem:[#allocation5 + $0xa8] sm:$0xff]
        %v296 = vld [vmem:[#allocation5 + $0xb0] sm:$0xff]
        %v297 = vld [vmem:[#allocation5 + $0xb8] sm:$0xff]
        %v298 = vld [vmem:[#allocation5 + $0xc0] sm:$0xff]
        %v299 = vld [vmem:[#allocation5 + $0xc8] sm:$0xff]
        %v300 = vld [vmem:[#allocation5 + $0xd0] sm:$0xff]
        %v301 = vld [vmem:[#allocation5 + $0xd8] sm:$0xff]
        %v302 = vld [vmem:[#allocation5 + $0xe0] sm:$0xff]
        %v303 = vld [vmem:[#allocation5 + $0xe8] sm:$0xff]
        %v304 = vld [vmem:[#allocation5 + $0xf0] sm:$0xff]
        %v305 = vld [vmem:[#allocation5 + $0xf8] sm:$0xff]
        %v306 = vld [vmem:[%s2] sm:$0x3]
        %v308 = vlaneseq
        %v309 = vshrl.u32 %v308, 7
        %v310 = vsub.s32 0, %v309
        %v311 = vrot.slane %v306, %v310
        %v312 = vlaneseq
        %v313 = vshrl.u32 %v312, 7
        %v314 = vsub.s32 1, %v313
        %v315 = vrot.slane %v306, %v314
        %v350 = vunpack.c.l.b16 %v274
        %v351 = vunpack.c.h.b16 %v274
        %v352 = vunpack.c.l.b16 %v275
        %v353 = vunpack.c.h.b16 %v275
        %v354 = vunpack.c.l.b16 %v276
        %v355 = vunpack.c.h.b16 %v276
        %v356 = vunpack.c.l.b16 %v277
        %v357 = vunpack.c.h.b16 %v277
        %v358 = vunpack.c.l.b16 %v278
        %v359 = vunpack.c.h.b16 %v278
        %v360 = vunpack.c.l.b16 %v279
        %v361 = vunpack.c.h.b16 %v279
        %v362 = vunpack.c.l.b16 %v280
        %v363 = vunpack.c.h.b16 %v280
        %v364 = vunpack.c.l.b16 %v281
        %v365 = vunpack.c.h.b16 %v281
        %v366 = vunpack.c.l.b16 %v282
        %v367 = vunpack.c.h.b16 %v282
        %v368 = vunpack.c.l.b16 %v283
        %v369 = vunpack.c.h.b16 %v283
        %v370 = vunpack.c.l.b16 %v284
        %v371 = vunpack.c.h.b16 %v284
        %v372 = vunpack.c.l.b16 %v285
        %v373 = vunpack.c.h.b16 %v285
        %v374 = vunpack.c.l.b16 %v286
        %v375 = vunpack.c.h.b16 %v286
        %v376 = vunpack.c.l.b16 %v287
        %v377 = vunpack.c.h.b16 %v287
        %v378 = vunpack.c.l.b16 %v288
        %v379 = vunpack.c.h.b16 %v288
        %v380 = vunpack.c.l.b16 %v289
        %v381 = vunpack.c.h.b16 %v289
        %v382 = vunpack.c.l.b16 %v290
        %v383 = vunpack.c.h.b16 %v290
        %v384 = vunpack.c.l.b16 %v291
        %v385 = vunpack.c.h.b16 %v291
        %v386 = vunpack.c.l.b16 %v292
        %v387 = vunpack.c.h.b16 %v292
        %v388 = vunpack.c.l.b16 %v293
        %v389 = vunpack.c.h.b16 %v293
        %v390 = vunpack.c.l.b16 %v294
        %v391 = vunpack.c.h.b16 %v294
        %v392 = vunpack.c.l.b16 %v295
        %v393 = vunpack.c.h.b16 %v295
        %v394 = vunpack.c.l.b16 %v296
        %v395 = vunpack.c.h.b16 %v296
        %v396 = vunpack.c.l.b16 %v297
        %v397 = vunpack.c.h.b16 %v297
        %v398 = vunpack.c.l.b16 %v298
        %v399 = vunpack.c.h.b16 %v298
        %v400 = vunpack.c.l.b16 %v299
        %v401 = vunpack.c.h.b16 %v299
        %v402 = vunpack.c.l.b16 %v300
        %v403 = vunpack.c.h.b16 %v300
        %v404 = vunpack.c.l.b16 %v301
        %v405 = vunpack.c.h.b16 %v301
        %v406 = vunpack.c.l.b16 %v302
        %v407 = vunpack.c.h.b16 %v302
        %v408 = vunpack.c.l.b16 %v303
        %v409 = vunpack.c.h.b16 %v303
        %v410 = vunpack.c.l.b16 %v304
        %v411 = vunpack.c.h.b16 %v304
        %v412 = vunpack.c.l.b16 %v305
        %v413 = vunpack.c.h.b16 %v305
        %v414 = vpack.c.b16 %v352, %v350
        %v415 = vpack.c.b16 %v353, %v351
        %v416 = vpack.c.b16 %v356, %v354
        %v417 = vpack.c.b16 %v357, %v355
        %v418 = vpack.c.b16 %v360, %v358
        %v419 = vpack.c.b16 %v361, %v359
        %v420 = vpack.c.b16 %v364, %v362
        %v421 = vpack.c.b16 %v365, %v363
        %v422 = vpack.c.b16 %v368, %v366
        %v423 = vpack.c.b16 %v369, %v367
        %v424 = vpack.c.b16 %v372, %v370
        %v425 = vpack.c.b16 %v373, %v371
        %v426 = vpack.c.b16 %v376, %v374
        %v427 = vpack.c.b16 %v377, %v375
        %v428 = vpack.c.b16 %v380, %v378
        %v429 = vpack.c.b16 %v381, %v379
        %v430 = vpack.c.b16 %v384, %v382
        %v431 = vpack.c.b16 %v385, %v383
        %v432 = vpack.c.b16 %v388, %v386
        %v433 = vpack.c.b16 %v389, %v387
        %v434 = vpack.c.b16 %v392, %v390
        %v435 = vpack.c.b16 %v393, %v391
        %v436 = vpack.c.b16 %v396, %v394
        %v437 = vpack.c.b16 %v397, %v395
        %v438 = vpack.c.b16 %v400, %v398
        %v439 = vpack.c.b16 %v401, %v399
        %v440 = vpack.c.b16 %v404, %v402
        %v441 = vpack.c.b16 %v405, %v403
        %v442 = vpack.c.b16 %v408, %v406
        %v443 = vpack.c.b16 %v409, %v407
        %v444 = vpack.c.b16 %v412, %v410
        %v445 = vpack.c.b16 %v413, %v411
        %478 = vmatprep.subr.bf16.mxu0 %v429
        %479 = vmatpush1.bf16.msra.mxu0 %v428
        %480 = vmatprep.subr.bf16.mxu0 %v427
        %481 = vmatpush1.bf16.msra.mxu0 %v426
        %482 = vmatprep.subr.bf16.mxu0 %v425
        %483 = vmatpush1.bf16.msra.mxu0 %v424
        %484 = vmatprep.subr.bf16.mxu0 %v423
        %485 = vmatpush1.bf16.msra.mxu0 %v422
        %486 = vmatprep.subr.bf16.mxu0 %v421
        %487 = vmatpush1.bf16.msra.mxu0 %v420
        %488 = vmatprep.subr.bf16.mxu0 %v419
        %489 = vmatpush1.bf16.msra.mxu0 %v418
        %490 = vmatprep.subr.bf16.mxu0 %v417
        %491 = vmatpush1.bf16.msra.mxu0 %v416
        %492 = vmatprep.subr.bf16.mxu0 %v415
        %493 = vmatpush1.bf16.msra.mxu0 %v414
        %494 = vmatprep.subr.bf16.mxu0 %v445
        %495 = vmatpush2.bf16.msra.mxu0 %v444
        %496 = vmatprep.subr.bf16.mxu0 %v443
        %497 = vmatpush2.bf16.msra.mxu0 %v442
        %498 = vmatprep.subr.bf16.mxu0 %v441
        %499 = vmatpush2.bf16.msra.mxu0 %v440
        %500 = vmatprep.subr.bf16.mxu0 %v439
        %501 = vmatpush2.bf16.msra.mxu0 %v438
        %502 = vmatprep.subr.bf16.mxu0 %v437
        %503 = vmatpush2.bf16.msra.mxu0 %v436
        %504 = vmatprep.subr.bf16.mxu0 %v435
        %505 = vmatpush2.bf16.msra.mxu0 %v434
        %506 = vmatprep.subr.bf16.mxu0 %v433
        %507 = vmatpush2.bf16.msra.mxu0 %v432
        %508 = vmatprep.subr.bf16.mxu0 %v431
        %509 = vmatpush2.bf16.msra.mxu0 %v430
        %510 = vmatprep.mubr.bf16.mxu0 %v273
        %511 = vmatmul.mubr.bf16.gmra.mxu0 %v272
        %v512 = vpop.f32.mrf.mxu0
        %v513 = vadd.f32 %v311, %v512
        %v514 = vpop.f32.mrf.mxu0
        %v515 = vadd.f32 %v315, %v514
        %v516 = vpop.f32.mrf.mxu0
        %v517 = vpop.f32.mrf.mxu0
        %518 = vdwg.mxu0
        %v519 = vmax.f32 %v513, 0.0
        %v520 = vmax.f32 %v515, 0.0
        %v521 = vpack.c.bf16 %v519, %v519
        %v522 = vpack.c.bf16 %v520, %v520
        %v523 = vld [vmem:[#allocation7] sm:$0xff]
        %v524 = vld [vmem:[#allocation7 + $0x8] sm:$0xff]
        %v525 = vld [vmem:[#allocation7 + $0x10] sm:$0xff]
        %v526 = vld [vmem:[#allocation7 + $0x18] sm:$0xff]
        %v527 = vld [vmem:[#allocation7 + $0x20] sm:$0xff]
        %v528 = vld [vmem:[#allocation7 + $0x28] sm:$0xff]
        %v529 = vld [vmem:[#allocation7 + $0x30] sm:$0xff]
        %v530 = vld [vmem:[#allocation7 + $0x38] sm:$0xff]
        %v531 = vld [vmem:[#allocation7 + $0x40] sm:$0xff]
        %v532 = vld [vmem:[#allocation7 + $0x48] sm:$0xff]
        %v533 = vld [vmem:[#allocation7 + $0x50] sm:$0xff]
        %v534 = vld [vmem:[#allocation7 + $0x58] sm:$0xff]
        %v535 = vld [vmem:[#allocation7 + $0x60] sm:$0xff]
        %v536 = vld [vmem:[#allocation7 + $0x68] sm:$0xff]
        %v537 = vld [vmem:[#allocation7 + $0x70] sm:$0xff]
        %v538 = vld [vmem:[#allocation7 + $0x78] sm:$0xff]
        %v539 = vld [vmem:[#allocation7 + $0x80] sm:$0xff]
        %v540 = vld [vmem:[#allocation7 + $0x88] sm:$0xff]
        %v541 = vld [vmem:[#allocation7 + $0x90] sm:$0xff]
        %v542 = vld [vmem:[#allocation7 + $0x98] sm:$0xff]
        %v543 = vld [vmem:[#allocation7 + $0xa0] sm:$0xff]
        %v544 = vld [vmem:[#allocation7 + $0xa8] sm:$0xff]
        %v545 = vld [vmem:[#allocation7 + $0xb0] sm:$0xff]
        %v546 = vld [vmem:[#allocation7 + $0xb8] sm:$0xff]
        %v547 = vld [vmem:[#allocation7 + $0xc0] sm:$0xff]
        %v548 = vld [vmem:[#allocation7 + $0xc8] sm:$0xff]
        %v549 = vld [vmem:[#allocation7 + $0xd0] sm:$0xff]
        %v550 = vld [vmem:[#allocation7 + $0xd8] sm:$0xff]
        %v551 = vld [vmem:[#allocation7 + $0xe0] sm:$0xff]
        %v552 = vld [vmem:[#allocation7 + $0xe8] sm:$0xff]
        %v553 = vld [vmem:[#allocation7 + $0xf0] sm:$0xff]
        %v554 = vld [vmem:[#allocation7 + $0xf8] sm:$0xff]
        %v555 = vld [vmem:[%s4] sm:$0x3]
        %v557 = vlaneseq
        %v558 = vshrl.u32 %v557, 7
        %v559 = vsub.s32 0, %v558
        %v560 = vrot.slane %v555, %v559
        %v561 = vlaneseq
        %v562 = vshrl.u32 %v561, 7
        %v563 = vsub.s32 1, %v562
        %v564 = vrot.slane %v555, %v563
        %v599 = vunpack.c.l.b16 %v523
        %v600 = vunpack.c.h.b16 %v523
        %v601 = vunpack.c.l.b16 %v524
        %v602 = vunpack.c.h.b16 %v524
        %v603 = vunpack.c.l.b16 %v525
        %v604 = vunpack.c.h.b16 %v525
        %v605 = vunpack.c.l.b16 %v526
        %v606 = vunpack.c.h.b16 %v526
        %v607 = vunpack.c.l.b16 %v527
        %v608 = vunpack.c.h.b16 %v527
        %v609 = vunpack.c.l.b16 %v528
        %v610 = vunpack.c.h.b16 %v528
        %v611 = vunpack.c.l.b16 %v529
        %v612 = vunpack.c.h.b16 %v529
        %v613 = vunpack.c.l.b16 %v530
        %v614 = vunpack.c.h.b16 %v530
        %v615 = vunpack.c.l.b16 %v531
        %v616 = vunpack.c.h.b16 %v531
        %v617 = vunpack.c.l.b16 %v532
        %v618 = vunpack.c.h.b16 %v532
        %v619 = vunpack.c.l.b16 %v533
        %v620 = vunpack.c.h.b16 %v533
        %v621 = vunpack.c.l.b16 %v534
        %v622 = vunpack.c.h.b16 %v534
        %v623 = vunpack.c.l.b16 %v535
        %v624 = vunpack.c.h.b16 %v535
        %v625 = vunpack.c.l.b16 %v536
        %v626 = vunpack.c.h.b16 %v536
        %v627 = vunpack.c.l.b16 %v537
        %v628 = vunpack.c.h.b16 %v537
        %v629 = vunpack.c.l.b16 %v538
        %v630 = vunpack.c.h.b16 %v538
        %v631 = vunpack.c.l.b16 %v539
        %v632 = vunpack.c.h.b16 %v539
        %v633 = vunpack.c.l.b16 %v540
        %v634 = vunpack.c.h.b16 %v540
        %v635 = vunpack.c.l.b16 %v541
        %v636 = vunpack.c.h.b16 %v541
        %v637 = vunpack.c.l.b16 %v542
        %v638 = vunpack.c.h.b16 %v542
        %v639 = vunpack.c.l.b16 %v543
        %v640 = vunpack.c.h.b16 %v543
        %v641 = vunpack.c.l.b16 %v544
        %v642 = vunpack.c.h.b16 %v544
        %v643 = vunpack.c.l.b16 %v545
        %v644 = vunpack.c.h.b16 %v545
        %v645 = vunpack.c.l.b16 %v546
        %v646 = vunpack.c.h.b16 %v546
        %v647 = vunpack.c.l.b16 %v547
        %v648 = vunpack.c.h.b16 %v547
        %v649 = vunpack.c.l.b16 %v548
        %v650 = vunpack.c.h.b16 %v548
        %v651 = vunpack.c.l.b16 %v549
        %v652 = vunpack.c.h.b16 %v549
        %v653 = vunpack.c.l.b16 %v550
        %v654 = vunpack.c.h.b16 %v550
        %v655 = vunpack.c.l.b16 %v551
        %v656 = vunpack.c.h.b16 %v551
        %v657 = vunpack.c.l.b16 %v552
        %v658 = vunpack.c.h.b16 %v552
        %v659 = vunpack.c.l.b16 %v553
        %v660 = vunpack.c.h.b16 %v553
        %v661 = vunpack.c.l.b16 %v554
        %v662 = vunpack.c.h.b16 %v554
        %v663 = vpack.c.b16 %v601, %v599
        %v664 = vpack.c.b16 %v602, %v600
        %v665 = vpack.c.b16 %v605, %v603
        %v666 = vpack.c.b16 %v606, %v604
        %v667 = vpack.c.b16 %v609, %v607
        %v668 = vpack.c.b16 %v610, %v608
        %v669 = vpack.c.b16 %v613, %v611
        %v670 = vpack.c.b16 %v614, %v612
        %v671 = vpack.c.b16 %v617, %v615
        %v672 = vpack.c.b16 %v618, %v616
        %v673 = vpack.c.b16 %v621, %v619
        %v674 = vpack.c.b16 %v622, %v620
        %v675 = vpack.c.b16 %v625, %v623
        %v676 = vpack.c.b16 %v626, %v624
        %v677 = vpack.c.b16 %v629, %v627
        %v678 = vpack.c.b16 %v630, %v628
        %v679 = vpack.c.b16 %v633, %v631
        %v680 = vpack.c.b16 %v634, %v632
        %v681 = vpack.c.b16 %v637, %v635
        %v682 = vpack.c.b16 %v638, %v636
        %v683 = vpack.c.b16 %v641, %v639
        %v684 = vpack.c.b16 %v642, %v640
        %v685 = vpack.c.b16 %v645, %v643
        %v686 = vpack.c.b16 %v646, %v644
        %v687 = vpack.c.b16 %v649, %v647
        %v688 = vpack.c.b16 %v650, %v648
        %v689 = vpack.c.b16 %v653, %v651
        %v690 = vpack.c.b16 %v654, %v652
        %v691 = vpack.c.b16 %v657, %v655
        %v692 = vpack.c.b16 %v658, %v656
        %v693 = vpack.c.b16 %v661, %v659
        %v694 = vpack.c.b16 %v662, %v660
        %727 = vmatprep.subr.bf16.mxu0 %v678
        %728 = vmatpush1.bf16.msra.mxu0 %v677
        %729 = vmatprep.subr.bf16.mxu0 %v676
        %730 = vmatpush1.bf16.msra.mxu0 %v675
        %731 = vmatprep.subr.bf16.mxu0 %v674
        %732 = vmatpush1.bf16.msra.mxu0 %v673
        %733 = vmatprep.subr.bf16.mxu0 %v672
        %734 = vmatpush1.bf16.msra.mxu0 %v671
        %735 = vmatprep.subr.bf16.mxu0 %v670
        %736 = vmatpush1.bf16.msra.mxu0 %v669
        %737 = vmatprep.subr.bf16.mxu0 %v668
        %738 = vmatpush1.bf16.msra.mxu0 %v667
        %739 = vmatprep.subr.bf16.mxu0 %v666
        %740 = vmatpush1.bf16.msra.mxu0 %v665
        %741 = vmatprep.subr.bf16.mxu0 %v664
        %742 = vmatpush1.bf16.msra.mxu0 %v663
        %743 = vmatprep.subr.bf16.mxu0 %v694
        %744 = vmatpush2.bf16.msra.mxu0 %v693
        %745 = vmatprep.subr.bf16.mxu0 %v692
        %746 = vmatpush2.bf16.msra.mxu0 %v691
        %747 = vmatprep.subr.bf16.mxu0 %v690
        %748 = vmatpush2.bf16.msra.mxu0 %v689
        %749 = vmatprep.subr.bf16.mxu0 %v688
        %750 = vmatpush2.bf16.msra.mxu0 %v687
        %751 = vmatprep.subr.bf16.mxu0 %v686
        %752 = vmatpush2.bf16.msra.mxu0 %v685
        %753 = vmatprep.subr.bf16.mxu0 %v684
        %754 = vmatpush2.bf16.msra.mxu0 %v683
        %755 = vmatprep.subr.bf16.mxu0 %v682
        %756 = vmatpush2.bf16.msra.mxu0 %v681
        %757 = vmatprep.subr.bf16.mxu0 %v680
        %758 = vmatpush2.bf16.msra.mxu0 %v679
        %759 = vmatprep.mubr.bf16.mxu0 %v522
        %760 = vmatmul.mubr.bf16.gmra.mxu0 %v521
        %v761 = vpop.f32.mrf.mxu0
        %v762 = vadd.f32 %v560, %v761
        %v763 = vpop.f32.mrf.mxu0
        %v764 = vadd.f32 %v564, %v763
        %v765 = vpop.f32.mrf.mxu0
        %v766 = vpop.f32.mrf.mxu0
        %767 = vdwg.mxu0
        %v768 = vmax.f32 %v762, %v764
        %769 = vmax.xlane.f32.xlu0 %v768
        %v770 = vpop.xlane.xlu0 %769
        %v771 = vsub.f32 %v762, %v770
        %v772 = vsub.f32 %v764, %v770
        %v773 = vmul.f32 %v771, 1.442695
        %v774 = vpow.pop %v773
        %v775 = vmul.f32 %v772, 1.442695
        %v776 = vpow.pop %v775
        %v777 = vadd.f32 %v774, %v776
        %778 = vadd.xlane.f32.xlu0 %v777
        %v779 = vpop.xlane.xlu0 %778
        %v780 = vrcp.pop %v779
        %v781 = vmul.f32 %v774, %v780
        %v782 = vmul.f32 %v776, %v780
        %v783 = vmul.f32 %v781, %v270
        %v784 = vmul.f32 %v782, %v271
        %785 = vst [vmem:[%s269] sm:$0xff] %v783
        %786 = vst [vmem:[%s269 + $0x8] sm:$0xff] %v784
        %s787 = sand.u32 %s141, 1
        %s788 = scalar_lea.sflag [#allocation4], %s787
        %s789 = sand.u32 %s141, 1
        %s790 = smul.addr %s789, 16
        %s791 = scalar_lea.vmem [#allocation8], %s790
        // Predicated region
        $region53: #{tpu_custom_call.1} parent=39 // pred_check
          %p792 = pneg %p151
        $region54: #{tpu_custom_call.1} parent=39 // pred_check_branch
          %794 = sbr.rel (%p792) target = $region56
        $region55: #{tpu_custom_call.1} parent=39 // pred_region
          %s796 = ssub.s32 256, 256
          %797 = vsyncadd %s788, %s796
          %s798 = smul.addr %s23, 2
          %s799 = smul.addr %s798, 128
          %s800 = scalar_lea.hbm %s5, %s799
          %s802 = sshll.u32 %s791, 4
          %s803 = int_to_ptr.vmem [resolvable:$true] %s802
          %805 = dma.vmem_to_hbm [thread:$0]  %s803, 256, %s800, %s788
        $region56: #{tpu_custom_call.1} parent=39 // pred_fallthru
          _
      $region40: #{tpu_custom_call.1} parent=5 // pred_fallthru
        _
      %p806 = scmp.le.s32.totalorder 2, %s18
      // Predicated region
      $region57: #{tpu_custom_call.1} parent=5 // pred_check
        %p807 = pneg %p806
      $region58: #{tpu_custom_call.1} parent=5 // pred_check_branch
        %809 = sbr.rel (%p807) target = $region60
      $region59: #{tpu_custom_call.1} parent=5 // pred_region
        %s810 = ssub.s32 %s18, 2
        // Predicated region
        $region61: #{tpu_custom_call.1} parent=59 // pred_check
          %p811 = pneg %p157
        $region62: #{tpu_custom_call.1} parent=59 // pred_check_branch
          %813 = sbr.rel (%p811) target = $region64
        $region63: #{tpu_custom_call.1} parent=59 // pred_region
          %s814 = sand.u32 %s142, 1
          %s815 = scalar_lea.sflag [#allocation4], %s814
          %s816 = sand.u32 %s142, 1
          %s817 = smul.addr %s816, 16
          %s818 = scalar_lea.vmem [#allocation8], %s817
          %819 = dma.done %s815, 256
        $region64: #{tpu_custom_call.1} parent=59 // pred_fallthru
          _
      $region60: #{tpu_custom_call.1} parent=5 // pred_fallthru
        _
    $region6: #{tpu_custom_call.1} parent=1 // loop_footer
      %s22 = sadd.s32 1, %s18
    $region7: #{tpu_custom_call.1} parent=1 // loop_footer_branch
      %17 = sbr.rel target = $region3
    $region8: #{tpu_custom_call.1} parent=1 // loop_exit
      _
    %820 = vsyncpa [#allocation3], 1
    %s821 = scalar_lea.sflag [#allocation3], 1
    %822 = vsyncpa %s821, 1
    %823 = vsyncpa [#allocation6], 1
    %824 = vsyncpa [#allocation4], 1
    %s825 = scalar_lea.sflag [#allocation4], 1
    %826 = vsyncpa %s825, 1

</llo_original>
